<compile_context>
chip_gen: v7x
topology: tpu7x:2x2x1
jax: 0.10.0
libtpu: 0.0.40
codegen_flags: <defaults>
</compile_context>

<pallas_src>
import jax
import jax.numpy as jnp
from jax.experimental import pallas as pl
from jax.experimental.pallas import tpu as pltpu


def _make_kernel(tb, tp, d):
    """Builds the gridded kernel body with static tile sizes closed over."""

    def kernel(patches_ref, w_emb_ref, b_emb_ref, w_head_ref, b_head_ref,
               out_ref, acc_ref):
        j = pl.program_id(1)                      # patch-tile (reduction) axis

        @pl.when(j == 0)
        def _():
            acc_ref[...] = jnp.zeros_like(acc_ref)

        # Patch embedding: flatten (batch-tile, patch-tile) into one 2-D MXU
        # matmul [tb*tp, F] @ [F, D].  Channel normalization is already folded
        # into w_emb/b_emb on the host.
        x = patches_ref[...]                      # [tb, tp, F]  bf16
        x2d = x.reshape(tb * tp, x.shape[-1])
        emb = jnp.dot(x2d, w_emb_ref[...],
                      preferred_element_type=jnp.float32)       # [tb*tp, D] f32
        emb = jax.nn.gelu(emb + b_emb_ref[...], approximate=True)   # f32 epilogue

        # Global-average-pool accumulates across the patch-tile grid axis.
        # (Padded patch rows contribute gelu(b_emb); corrected in the head
        # bias on the host — no per-step masking needed.)
        acc_ref[...] += jnp.sum(emb.reshape(tb, tp, d), axis=1)    # [tb, D] f32

        @pl.when(j == pl.num_programs(1) - 1)
        def _():
            # 1/nP and the padded-row correction are folded into w_head/b_head,
            # so finalize is just: logits = acc @ w_head + b_head.
            logits = jnp.dot(acc_ref[...],
                             w_head_ref[...].astype(jnp.float32),
                             preferred_element_type=jnp.float32)
            out_ref[...] = (logits + b_head_ref[...]).astype(out_ref.dtype)

    return kernel


def imagenet_cls_forward(x_nchw, mean, std, w_emb, b_emb, w_head, b_head,
                         patch, *, tb=8, tp=16, vmem_limit_bytes=None):
    """x_nchw: [N, C, H, W] in [0, 1].  Returns logits [N, K]."""
    N, C, H, W = x_nchw.shape
    assert H % patch == 0 and W % patch == 0
    assert tb % 8 == 0 and tp % 16 == 0, "tb%8==0, tp%16==0 (bf16 sublane tile)"
    nP = (H // patch) * (W // patch)
    F = patch * patch * C
    D = w_emb.shape[1]
    K = w_head.shape[1]
    assert D % 128 == 0, "embed dim must be a multiple of 128"

    # --- layout glue: cast to bf16 first (halves host-side HBM traffic), then
    #     NCHW -> non-overlapping patches [N, nP, P*P*C] (C fastest).
    x_bf = x_nchw.astype(jnp.bfloat16)
    x_nhwc = jnp.transpose(x_bf, (0, 2, 3, 1))
    patches = x_nhwc.reshape(N, H // patch, patch, W // patch, patch, C)
    patches = jnp.transpose(patches, (0, 1, 3, 2, 4, 5)).reshape(N, nP, F)

    # --- fold (x - mean)/std into the embed weights (the normalize is linear
    #     and feeds straight into the matmul):
    #     ((x - m) * s^-1) @ W + b  ==  x @ (s^-1 * W) + (b - (m * s^-1) @ W)
    inv_std_vec = jnp.tile((1.0 / std).astype(jnp.float32), patch * patch)   # [F]
    mean_vec = jnp.tile(mean.astype(jnp.float32), patch * patch)             # [F]
    w_emb32 = w_emb.astype(jnp.float32)
    w_emb_fold = w_emb32 * inv_std_vec[:, None]                              # [F, D]
    b_emb_fold = (b_emb.reshape(-1).astype(jnp.float32)
                  - (mean_vec * inv_std_vec) @ w_emb32)                      # [D]

    def _rup(a, m):
        return (a + m - 1) // m * m

    Kp = _rup(K, 128)        # lane-dense class dim for the output store
    Np = _rup(N, tb)
    nPp = _rup(nP, tp)

    # --- pad only what must be padded; feature dim F is streamed un-padded.
    if (Np, nPp) != (N, nP):
        patches_p = jnp.pad(patches, ((0, Np - N), (0, nPp - nP), (0, 0)))
    else:
        patches_p = patches

    w_emb_p = w_emb_fold.astype(jnp.bfloat16)            # [F, D]
    b_emb_p = b_emb_fold.reshape(1, D)                   # [1, D] f32

    # --- fold 1/nP pooling divide + padded-patch-row correction into the head.
    #     Padded (zero) patch rows add gelu(b_emb_fold) to the per-row sum; the
    #     correction is computed against the bf16-rounded head weights so it
    #     cancels the in-kernel contribution exactly (up to f32 rounding).
    w_head_scaled = w_head.astype(jnp.float32) * (1.0 / nP)                  # [D, K]
    w_head_bf = w_head_scaled.astype(jnp.bfloat16)
    pad_rows = nPp - nP
    pad_corr = pad_rows * jax.nn.gelu(b_emb_fold, approximate=True)          # [D]
    b_head_adj = (b_head.reshape(-1).astype(jnp.float32)
                  - pad_corr @ w_head_bf.astype(jnp.float32))                # [K]

    w_head_p = jnp.pad(w_head_bf, ((0, 0), (0, Kp - K)))                     # [D, Kp]
    b_head_p = jnp.pad(b_head_adj.reshape(1, K), ((0, 0), (0, Kp - K)))      # [1, Kp]

    grid = (Np // tb, nPp // tp)
    kernel = _make_kernel(tb, tp, D)

    cost = pl.CostEstimate(
        flops=int(2 * Np * nPp * F * D + 2 * Np * D * Kp),
        transcendentals=int(Np * nPp * D),                 # one tanh per GELU
        bytes_accessed=int(Np * nPp * F * 2                # streamed bf16 patches
                           + F * D * 2 + D * 4             # embed weights/bias
                           + D * Kp * 2 + Kp * 4           # head weights/bias
                           + Np * Kp * 4))                 # f32 logits out

    out = pl.pallas_call(
        kernel,
        out_shape=jax.ShapeDtypeStruct((Np, Kp), jnp.float32),
        grid_spec=pltpu.PrefetchScalarGridSpec(
            num_scalar_prefetch=0,
            grid=grid,
            in_specs=[
                # streamed patch tiles (last dim = full extent F, un-padded)
                pl.BlockSpec((tb, tp, F), lambda i, j: (i, j, 0)),
                # weights / biases: constant index_maps -> DMA'd once, resident
                pl.BlockSpec((F, D), lambda i, j: (0, 0)),
                pl.BlockSpec((1, D), lambda i, j: (0, 0)),
                pl.BlockSpec((D, Kp), lambda i, j: (0, 0)),
                pl.BlockSpec((1, Kp), lambda i, j: (0, 0)),
            ],
            out_specs=pl.BlockSpec((tb, Kp), lambda i, j: (i, 0)),
            scratch_shapes=[pltpu.VMEM((tb, D), jnp.float32)],
        ),
        compiler_params=pltpu.CompilerParams(
            dimension_semantics=("parallel", "arbitrary"),
            vmem_limit_bytes=vmem_limit_bytes),
        cost_estimate=cost,
    )(patches_p, w_emb_p, b_emb_p, w_head_p, b_head_p)

    return out[:N, :K]


def _reference(x_nchw, mean, std, w_emb, b_emb, w_head, b_head, patch):
    """Pure-JAX f32 reference in the original (un-folded) form."""
    N, C, H, W = x_nchw.shape
    nP = (H // patch) * (W // patch)
    F = patch * patch * C
    xn = (x_nchw - mean.reshape(1, C, 1, 1)) / std.reshape(1, C, 1, 1)
    x_nhwc = jnp.transpose(xn, (0, 2, 3, 1))
    p = x_nhwc.reshape(N, H // patch, patch, W // patch, patch, C)
    p = jnp.transpose(p, (0, 1, 3, 2, 4, 5)).reshape(N, nP, F)
    emb = jax.nn.gelu(jnp.einsum('npf,fd->npd', p, w_emb)
                      + b_emb.reshape(1, 1, -1), approximate=True)
    pooled = emb.mean(axis=1)
    return pooled @ w_head + b_head.reshape(1, -1)


if __name__ == "__main__":
    # Small shapes consistent with the module: ImageNet-style 3-channel images.
    N, C, H, W = 2, 3, 16, 16
    PATCH = 4
    D = 128     # embed dim (multiple of 128)
    K = 32      # num classes (synthetic; real model uses 1000)
    F = PATCH * PATCH * C

    key = jax.random.PRNGKey(0)
    kx, k1, k2, k3, k4, kx2 = jax.random.split(key, 6)

    mean = jnp.array([0.485, 0.456, 0.406], dtype=jnp.float32)       # ImageNet mean
    std = jnp.array([0.229, 0.224, 0.225], dtype=jnp.float32)        # ImageNet std

    w_emb = jax.random.normal(k1, (F, D), dtype=jnp.float32) * 0.05
    b_emb = jax.random.normal(k2, (D,), dtype=jnp.float32) * 0.01
    w_head = jax.random.normal(k3, (D, K), dtype=jnp.float32) * 0.05
    b_head = jax.random.normal(k4, (K,), dtype=jnp.float32) * 0.01

    # TODO(synk): the real model-zoo backbone (resnet50 / vit_base_patch16) and
    # checkpoint download/loading have no in-kernel equivalent; a representative
    # patch-embed + pool + linear-head classifier is implemented instead.

    # Case 1: patch count divides the tile exactly (nP = 16, tp = 16).
    x = jax.random.uniform(kx, (N, C, H, W), dtype=jnp.float32)      # range [0, 1]
    logits = imagenet_cls_forward(x, mean, std, w_emb, b_emb, w_head, b_head,
                                  PATCH, tb=8, tp=16)
    logits = jax.block_until_ready(logits)
    ref = _reference(x, mean, std, w_emb, b_emb, w_head, b_head, PATCH)
    assert logits.shape == (N, K)
    # bf16 matmul inputs (f32 accumulation) -> loosened tolerance vs f32 ref.
    assert jnp.allclose(logits, ref, atol=3e-2, rtol=3e-2), "mismatch vs reference"

    # Case 2: ragged patch count (nP = 25 -> padded to 32): exercises the
    # padded-row bias fold and the multi-step patch-reduction grid.
    x2 = jax.random.uniform(kx2, (N, C, 20, 20), dtype=jnp.float32)
    logits2 = imagenet_cls_forward(x2, mean, std, w_emb, b_emb, w_head, b_head,
                                   PATCH, tb=8, tp=16)
    logits2 = jax.block_until_ready(logits2)
    ref2 = _reference(x2, mean, std, w_emb, b_emb, w_head, b_head, PATCH)
    assert logits2.shape == (N, K)
    assert jnp.allclose(logits2, ref2, atol=3e-2, rtol=3e-2), "ragged mismatch"

    print("KERNEL_OK")
</pallas_src>

<mosaic_0001>
module attributes {stable_mosaic.version = 11 : i64} {
  func.func @kernel(%arg0: i32, %arg1: i32, %arg2: memref<8x16x48xbf16, #tpu.memory_space<vmem>>, %arg3: memref<48x128xbf16, #tpu.memory_space<vmem>>, %arg4: memref<1x128xf32, #tpu.memory_space<vmem>>, %arg5: memref<128x128xbf16, #tpu.memory_space<vmem>>, %arg6: memref<1x128xf32, #tpu.memory_space<vmem>>, %arg7: memref<8x128xf32, #tpu.memory_space<vmem>>, %arg8: memref<8x128xf32, #tpu.memory_space<vmem>>) attributes {dimension_semantics = [#tpu.dimension_semantics<parallel>, #tpu.dimension_semantics<arbitrary>], iteration_bounds = array<i64: 1, 1>, scalar_prefetch = 0 : i64, scratch_operands = 1 : i64, tpu.core_type = #tpu.core_type<tc>, window_params = [{transform_indices = @transform_0, window_bounds = array<i64: 8, 16, 48>}, {pipeline_mode = #tpu.pipeline_mode<synchronous>, transform_indices = @transform_1, window_bounds = array<i64: 48, 128>}, {pipeline_mode = #tpu.pipeline_mode<synchronous>, transform_indices = @transform_2, window_bounds = array<i64: 1, 128>}, {pipeline_mode = #tpu.pipeline_mode<synchronous>, transform_indices = @transform_3, window_bounds = array<i64: 128, 128>}, {pipeline_mode = #tpu.pipeline_mode<synchronous>, transform_indices = @transform_4, window_bounds = array<i64: 1, 128>}, {transform_indices = @transform_5, window_bounds = array<i64: 8, 128>}]} {
    %c0_i32 = arith.constant 0 : i32
    %0 = arith.cmpi eq, %arg1, %c0_i32 : i32
    %1 = arith.extui %0 : i1 to i32
    %c0_i32_0 = arith.constant 0 : i32
    %2 = arith.cmpi ne, %1, %c0_i32_0 : i32
    scf.if %2 {
      %cst_18 = arith.constant 0.000000e+00 : f32
      %31 = vector.broadcast %cst_18 : f32 to vector<8x128xf32>
      %c0_19 = arith.constant 0 : index
      %c0_20 = arith.constant 0 : index
      %32 = vector.load %arg8[%c0_19, %c0_20] : memref<8x128xf32, #tpu.memory_space<vmem>>, vector<8x128xf32>
      tpu.vector_store %arg8[%c0_19, %c0_20], %31 {strides = array<i32>} : memref<8x128xf32, #tpu.memory_space<vmem>>, vector<8x128xf32>,
    } else {
    }
    %c0 = arith.constant 0 : index
    %c0_1 = arith.constant 0 : index
    %c0_2 = arith.constant 0 : index
    %3 = vector.load %arg2[%c0, %c0_1, %c0_2] : memref<8x16x48xbf16, #tpu.memory_space<vmem>>, vector<8x16x48xbf16>
    %4 = vector.shape_cast %3 : vector<8x16x48xbf16> to vector<128x48xbf16>
    %c0_3 = arith.constant 0 : index
    %c0_4 = arith.constant 0 : index
    %5 = vector.load %arg3[%c0_3, %c0_4] : memref<48x128xbf16, #tpu.memory_space<vmem>>, vector<48x128xbf16>
    %cst = arith.constant dense<0.000000e+00> : vector<128x128xf32>
    %6 = tpu.matmul %4, %5, %cst {dimension_numbers = #tpu.dot_dimension_numbers<[1], [0], [0], [1], [0, 0, 1, 1], [], []>} : vector<128x48xbf16>, vector<48x128xbf16>, vector<128x128xf32> -> vector<128x128xf32>
    %c0_5 = arith.constant 0 : index
    %c0_6 = arith.constant 0 : index
    %7 = vector.load %arg4[%c0_5, %c0_6] : memref<1x128xf32, #tpu.memory_space<vmem>>, vector<1x128xf32>
    %8 = vector.broadcast %7 : vector<1x128xf32> to vector<128x128xf32>
    %9 = arith.addf %6, %8 : vector<128x128xf32>
    %10 = arith.mulf %9, %9 : vector<128x128xf32>
    %11 = arith.mulf %9, %10 : vector<128x128xf32>
    %cst_7 = arith.constant 4.471500e-02 : f32
    %12 = vector.broadcast %cst_7 : f32 to vector<128x128xf32>
    %13 = arith.mulf %12, %11 : vector<128x128xf32>
    %14 = arith.addf %9, %13 : vector<128x128xf32>
    %cst_8 = arith.constant 0.797884583 : f32
    %15 = vector.broadcast %cst_8 : f32 to vector<128x128xf32>
    %16 = arith.mulf %15, %14 : vector<128x128xf32>
    %17 = math.tanh %16 : vector<128x128xf32>
    %cst_9 = arith.constant 1.000000e+00 : f32
    %18 = vector.broadcast %cst_9 : f32 to vector<128x128xf32>
    %19 = arith.addf %18, %17 : vector<128x128xf32>
    %cst_10 = arith.constant 5.000000e-01 : f32
    %20 = vector.broadcast %cst_10 : f32 to vector<128x128xf32>
    %21 = arith.mulf %20, %19 : vector<128x128xf32>
    %22 = arith.mulf %9, %21 : vector<128x128xf32>
    %c0_11 = arith.constant 0 : index
    %c0_12 = arith.constant 0 : index
    %23 = vector.load %arg8[%c0_11, %c0_12] : memref<8x128xf32, #tpu.memory_space<vmem>>, vector<8x128xf32>
    %24 = vector.shape_cast %22 : vector<128x128xf32> to vector<8x16x128xf32>
    %cst_13 = arith.constant dense<0.000000e+00> : vector<8x128xf32>
    %25 = vector.multi_reduction <add>, %24, %cst_13 [1] : vector<8x16x128xf32> to vector<8x128xf32>
    %26 = arith.addf %23, %25 : vector<8x128xf32>
    %c0_14 = arith.constant 0 : index
    %c0_15 = arith.constant 0 : index
    %27 = vector.load %arg8[%c0_14, %c0_15] : memref<8x128xf32, #tpu.memory_space<vmem>>, vector<8x128xf32>
    tpu.vector_store %arg8[%c0_14, %c0_15], %26 {strides = array<i32>} : memref<8x128xf32, #tpu.memory_space<vmem>>, vector<8x128xf32>,
    %c0_i32_16 = arith.constant 0 : i32
    %28 = arith.cmpi eq, %arg1, %c0_i32_16 : i32
    %29 = arith.extui %28 : i1 to i32
    %c0_i32_17 = arith.constant 0 : i32
    %30 = arith.cmpi ne, %29, %c0_i32_17 : i32
    scf.if %30 {
      %c0_18 = arith.constant 0 : index
      %c0_19 = arith.constant 0 : index
      %31 = vector.load %arg8[%c0_18, %c0_19] : memref<8x128xf32, #tpu.memory_space<vmem>>, vector<8x128xf32>
      %c0_20 = arith.constant 0 : index
      %c0_21 = arith.constant 0 : index
      %32 = vector.load %arg5[%c0_20, %c0_21] : memref<128x128xbf16, #tpu.memory_space<vmem>>, vector<128x128xbf16>
      %33 = arith.extf %32 : vector<128x128xbf16> to vector<128x128xf32>
      %cst_22 = arith.constant dense<0.000000e+00> : vector<8x128xf32>
      %34 = tpu.matmul %31, %33, %cst_22 {dimension_numbers = #tpu.dot_dimension_numbers<[1], [0], [0], [1], [0, 0, 1, 1], [], []>} : vector<8x128xf32>, vector<128x128xf32>, vector<8x128xf32> -> vector<8x128xf32>
      %c0_23 = arith.constant 0 : index
      %c0_24 = arith.constant 0 : index
      %35 = vector.load %arg6[%c0_23, %c0_24] : memref<1x128xf32, #tpu.memory_space<vmem>>, vector<1x128xf32>
      %36 = vector.broadcast %35 : vector<1x128xf32> to vector<8x128xf32>
      %37 = arith.addf %34, %36 : vector<8x128xf32>
      %c0_25 = arith.constant 0 : index
      %c0_26 = arith.constant 0 : index
      %38 = vector.load %arg7[%c0_25, %c0_26] : memref<8x128xf32, #tpu.memory_space<vmem>>, vector<8x128xf32>
      tpu.vector_store %arg7[%c0_25, %c0_26], %37 {strides = array<i32>} : memref<8x128xf32, #tpu.memory_space<vmem>>, vector<8x128xf32>,
    } else {
    }
    return
  }
  func.func @transform_0(%arg0: i32, %arg1: i32) -> (i32, i32, i32) {
    %c0_i32 = arith.constant 0 : i32
    %c0_i32_0 = arith.constant 0 : i32
    return %arg0, %arg1, %c0_i32 : i32, i32, i32
  }
  func.func @transform_1(%arg0: i32, %arg1: i32) -> (i32, i32) {
    %c0_i32 = arith.constant 0 : i32
    %c0_i32_0 = arith.constant 0 : i32
    %c0_i32_1 = arith.constant 0 : i32
    return %c0_i32, %c0_i32_0 : i32, i32
  }
  func.func @transform_2(%arg0: i32, %arg1: i32) -> (i32, i32) {
    %c0_i32 = arith.constant 0 : i32
    %c0_i32_0 = arith.constant 0 : i32
    %c0_i32_1 = arith.constant 0 : i32
    return %c0_i32, %c0_i32_0 : i32, i32
  }
  func.func @transform_3(%arg0: i32, %arg1: i32) -> (i32, i32) {
    %c0_i32 = arith.constant 0 : i32
    %c0_i32_0 = arith.constant 0 : i32
    %c0_i32_1 = arith.constant 0 : i32
    return %c0_i32, %c0_i32_0 : i32, i32
  }
  func.func @transform_4(%arg0: i32, %arg1: i32) -> (i32, i32) {
    %c0_i32 = arith.constant 0 : i32
    %c0_i32_0 = arith.constant 0 : i32
    %c0_i32_1 = arith.constant 0 : i32
    return %c0_i32, %c0_i32_0 : i32, i32
  }
  func.func @transform_5(%arg0: i32, %arg1: i32) -> (i32, i32) {
    %c0_i32 = arith.constant 0 : i32
    %c0_i32_0 = arith.constant 0 : i32
    return %arg0, %c0_i32 : i32, i32
  }
}

</mosaic_0001>

<llo_original>
// kernel: tpu_custom_call.1
$region0: #{tpu_custom_call.1}
  #allocation0 [shape = 'u32[]', space=smem, size = 0x4, offset = 0x4, fixed_abs, tag = 'smem constant byte address 0x4 - core index']
  #allocation1 [shape = 'u32[144,128]{1,0:T(1,128)}', space=vmem, size = 0x12000, scoped, tag = 'internal scratch']
  #allocation2 [shape = 'f32[8,128]{1,0:T(8,128)}', space=vmem, size = 0x1000, scoped, tag = 'scratch operand']
  %s0 = inlined_call_operand.hbm [shape: bf16[8,16,48], index: 0, kind: input, shape index: {}]
  %s1 = inlined_call_operand.hbm [shape: bf16[48,128], index: 1, kind: input, shape index: {}]
  %s2 = inlined_call_operand.vmem [shape: f32[1,128], index: 2, kind: input, shape index: {}]
  %s3 = inlined_call_operand.hbm [shape: bf16[128,128], index: 3, kind: input, shape index: {}]
  %s4 = inlined_call_operand.vmem [shape: f32[1,128], index: 4, kind: input, shape index: {}]
  %s5 = inlined_call_operand.hbm [shape: f32[8,128], index: 5, kind: output, shape index: {}]
  %s6 = sld [smem:[#allocation0]]
  $region50: #{tpu_custom_call.1} parent=0
    _
  %s8 = ssub.s32 1, %s6
  %s9 = scalar_select 0, %s8, %s6
  $region1: #{tpu_custom_call.1} parent=0
    #allocation3 [shape = 'u8[32768]{0}', space=vmem, size = 0x8000, scoped, tag = 'input window, operand 0, single buffered']
    #allocation4 [shape = 's32[1]{0}', space=sflag, size = 0x4, scoped, tag = 'scoped memory for tpu_custom_call.1']
    #allocation5 [shape = 's32[1]{0}', space=sflag, size = 0x4, scoped, tag = 'scoped memory for tpu_custom_call.1']
    #allocation6 [shape = 'u8[12288]{0}', space=vmem, size = 0x3000, scoped, tag = 'input window, operand 1, single buffered']
    #allocation7 [shape = 's32[1]{0}', space=sflag, size = 0x4, scoped, tag = 'scoped memory for tpu_custom_call.1']
    #allocation8 [shape = 'u8[32768]{0}', space=vmem, size = 0x8000, scoped, tag = 'input window, operand 3, single buffered']
    #allocation9 [shape = 'u8[4096]{0}', space=vmem, size = 0x1000, scoped, tag = 'output window, operand 0, single buffered']
    %10 = vsyncpa [#allocation4], 0
    %11 = vsyncpa [#allocation7], 0
    %12 = vsyncpa [#allocation5], 0
    // Predicated region
    $region2: #{tpu_custom_call.1} parent=1 // pred_check
      _
    $region3: #{tpu_custom_call.1} parent=1 // pred_check_branch
      %14 = sbr.rel (0) target = $region5
    $region4: #{tpu_custom_call.1} parent=1 // pred_region
      %s16 = ssub.s32 1024, 1024
      %17 = vsyncadd [#allocation4], %s16
      %s18 = sshll.u32 [#allocation3], 4
      %s19 = int_to_ptr.vmem [resolvable:$true] %s18
      %24 = dma.hbm_to_vmem [thread:$0]  %s0, 1024, %s19, [#allocation4], 64, 64, 4
    $region5: #{tpu_custom_call.1} parent=1 // pred_fallthru
      _
    // Predicated region
    $region6: #{tpu_custom_call.1} parent=1 // pred_check
      _
    $region7: #{tpu_custom_call.1} parent=1 // pred_check_branch
      %26 = sbr.rel (0) target = $region9
    $region8: #{tpu_custom_call.1} parent=1 // pred_region
      %s28 = ssub.s32 384, 384
      %29 = vsyncadd [#allocation7], %s28
      %s30 = sshll.u32 [#allocation6], 4
      %s31 = int_to_ptr.vmem [resolvable:$true] %s30
      %36 = dma.hbm_to_vmem [thread:$0]  %s1, 384, %s31, [#allocation7], 64, 64, 4
    $region9: #{tpu_custom_call.1} parent=1 // pred_fallthru
      _
    // Predicated region
    $region10: #{tpu_custom_call.1} parent=1 // pred_check
      _
    $region11: #{tpu_custom_call.1} parent=1 // pred_check_branch
      %38 = sbr.rel (0) target = $region13
    $region12: #{tpu_custom_call.1} parent=1 // pred_region
      _
    $region13: #{tpu_custom_call.1} parent=1 // pred_fallthru
      _
    // Predicated region
    $region14: #{tpu_custom_call.1} parent=1 // pred_check
      _
    $region15: #{tpu_custom_call.1} parent=1 // pred_check_branch
      %40 = sbr.rel (0) target = $region17
    $region16: #{tpu_custom_call.1} parent=1 // pred_region
      %s42 = ssub.s32 1024, 1024
      %43 = vsyncadd [#allocation7], %s42
      %s44 = sshll.u32 [#allocation8], 4
      %s45 = int_to_ptr.vmem [resolvable:$true] %s44
      %50 = dma.hbm_to_vmem [thread:$0]  %s3, 1024, %s45, [#allocation7], 64, 64, 4
    $region17: #{tpu_custom_call.1} parent=1 // pred_fallthru
      _
    // Predicated region
    $region18: #{tpu_custom_call.1} parent=1 // pred_check
      _
    $region19: #{tpu_custom_call.1} parent=1 // pred_check_branch
      %52 = sbr.rel (0) target = $region21
    $region20: #{tpu_custom_call.1} parent=1 // pred_region
      _
    $region21: #{tpu_custom_call.1} parent=1 // pred_fallthru
      _
    // Predicated region
    $region22: #{tpu_custom_call.1} parent=1 // pred_check
      _
    $region23: #{tpu_custom_call.1} parent=1 // pred_check_branch
      %54 = sbr.rel (0) target = $region25
    $region24: #{tpu_custom_call.1} parent=1 // pred_region
      %55 = dma.done [#allocation4], 1024
    $region25: #{tpu_custom_call.1} parent=1 // pred_fallthru
      _
    // Predicated region
    $region26: #{tpu_custom_call.1} parent=1 // pred_check
      _
    $region27: #{tpu_custom_call.1} parent=1 // pred_check_branch
      %57 = sbr.rel (0) target = $region29
    $region28: #{tpu_custom_call.1} parent=1 // pred_region
      %58 = dma.done [#allocation7], 384
    $region29: #{tpu_custom_call.1} parent=1 // pred_fallthru
      _
    // Predicated region
    $region30: #{tpu_custom_call.1} parent=1 // pred_check
      _
    $region31: #{tpu_custom_call.1} parent=1 // pred_check_branch
      %60 = sbr.rel (0) target = $region33
    $region32: #{tpu_custom_call.1} parent=1 // pred_region
      %61 = dma.done [#allocation7], 1024
    $region33: #{tpu_custom_call.1} parent=1 // pred_fallthru
      _
    %p63 = scmp.eq.s32.totalorder 0, 0
    // Predicated region
    $region34: #{tpu_custom_call.1} parent=1 // pred_check
      %p64 = pneg %p63
    $region35: #{tpu_custom_call.1} parent=1 // pred_check_branch
      %66 = sbr.rel (%p64) target = $region37
    $region36: #{tpu_custom_call.1} parent=1 // pred_region
      %67 = vst [vmem:[#allocation2] sm:$0xff] 0.0
    $region37: #{tpu_custom_call.1} parent=1 // pred_fallthru
      _
    %v68 = vld [vmem:[#allocation3] sm:$0xf]
    %v69 = vld [vmem:[#allocation3 + $0x4] sm:$0xf]
    %v70 = vld [vmem:[#allocation3 + $0x8] sm:$0xf]
    %v71 = vld [vmem:[#allocation3 + $0xc] sm:$0xf]
    %v72 = vld [vmem:[#allocation3 + $0x10] sm:$0xf]
    %v73 = vld [vmem:[#allocation3 + $0x14] sm:$0xf]
    %v74 = vld [vmem:[#allocation3 + $0x18] sm:$0xf]
    %v75 = vld [vmem:[#allocation3 + $0x1c] sm:$0xf]
    %v76 = vld [vmem:[#allocation3 + $0x20] sm:$0xf]
    %v77 = vld [vmem:[#allocation3 + $0x24] sm:$0xf]
    %v78 = vld [vmem:[#allocation3 + $0x28] sm:$0xf]
    %v79 = vld [vmem:[#allocation3 + $0x2c] sm:$0xf]
    %v80 = vld [vmem:[#allocation3 + $0x30] sm:$0xf]
    %v81 = vld [vmem:[#allocation3 + $0x34] sm:$0xf]
    %v82 = vld [vmem:[#allocation3 + $0x38] sm:$0xf]
    %v83 = vld [vmem:[#allocation3 + $0x3c] sm:$0xf]
    %v84 = vld [vmem:[#allocation6] sm:$0xf]
    %v85 = vld [vmem:[#allocation6 + $0x4] sm:$0xf]
    %v86 = vld [vmem:[#allocation6 + $0x8] sm:$0xf]
    %v87 = vld [vmem:[#allocation6 + $0xc] sm:$0xf]
    %v88 = vld [vmem:[#allocation6 + $0x10] sm:$0xf]
    %v89 = vld [vmem:[#allocation6 + $0x14] sm:$0xf]
    %v90 = vld [vmem:[%s2] sm:$0x1]
    %v92 = vlaneseq
    %v93 = vshrl.u32 %v92, 7
    %v94 = vsub.s32 0, %v93
    %v95 = vrot.slane %v90, %v94
    %v113 = vunpack.c.l.b16 %v68
    %v114 = vunpack.c.l.b16 %v69
    %v115 = vunpack.c.l.b16 %v70
    %v116 = vunpack.c.l.b16 %v71
    %v117 = vunpack.c.l.b16 %v72
    %v118 = vunpack.c.l.b16 %v73
    %v119 = vunpack.c.l.b16 %v74
    %v120 = vunpack.c.l.b16 %v75
    %v121 = vunpack.c.l.b16 %v76
    %v122 = vunpack.c.l.b16 %v77
    %v123 = vunpack.c.l.b16 %v78
    %v124 = vunpack.c.l.b16 %v79
    %v125 = vunpack.c.l.b16 %v80
    %v126 = vunpack.c.l.b16 %v81
    %v127 = vunpack.c.l.b16 %v82
    %v128 = vunpack.c.l.b16 %v83
    %v129 = vpack.c.b16 %v114, %v113
    %v130 = vpack.c.b16 %v116, %v115
    %v131 = vpack.c.b16 %v118, %v117
    %v132 = vpack.c.b16 %v120, %v119
    %v133 = vpack.c.b16 %v122, %v121
    %v134 = vpack.c.b16 %v124, %v123
    %v135 = vpack.c.b16 %v126, %v125
    %v136 = vpack.c.b16 %v128, %v127
    %v143 = vunpack.c.l.b16 %v84
    %v144 = vunpack.c.l.b16 %v85
    %v145 = vunpack.c.l.b16 %v86
    %v146 = vunpack.c.l.b16 %v87
    %v147 = vunpack.c.l.b16 %v88
    %v148 = vunpack.c.l.b16 %v89
    %v149 = vpack.c.b16 %v144, %v143
    %v150 = vpack.c.b16 %v146, %v145
    %v151 = vpack.c.b16 %v148, %v147
    %vm155 = vcmask 392192
    %v157 = vsel %vm155, %v129, 0
    %v160 = vsel %vm155, %v130, 0
    %v163 = vsel %vm155, %v131, 0
    %v166 = vsel %vm155, %v132, 0
    %v169 = vsel %vm155, %v133, 0
    %v172 = vsel %vm155, %v134, 0
    %v175 = vsel %vm155, %v135, 0
    %v178 = vsel %vm155, %v136, 0
    %180 = vmatprep.subr.bf16.mxu0 0
    %181 = vmatpush1.bf16.msra.mxu0 %v149
    %182 = vmatprep.subr.bf16.mxu0 0
    %183 = vmatpush1.bf16.msra.mxu0 %v150
    %184 = vmatprep.subr.bf16.mxu0 0
    %185 = vmatpush1.bf16.msra.mxu0 %v151
    %186 = vmatprep.subr.bf16.mxu0 0
    %187 = vmatpush1.bf16.msra.mxu0 0
    %188 = vmatprep.subr.bf16.mxu0 0
    %189 = vmatpush1.bf16.msra.mxu0 0
    %190 = vmatprep.subr.bf16.mxu0 0
    %191 = vmatpush1.bf16.msra.mxu0 0
    %192 = vmatprep.subr.bf16.mxu0 0
    %193 = vmatpush1.bf16.msra.mxu0 0
    %194 = vmatprep.subr.bf16.mxu0 0
    %195 = vmatpush1.bf16.msra.mxu0 0
    %196 = vmatprep.subr.bf16.mxu0 0
    %197 = vmatpush1.bf16.msra.mxu0 0
    %198 = vmatprep.subr.bf16.mxu0 0
    %199 = vmatpush1.bf16.msra.mxu0 0
    %200 = vmatprep.subr.bf16.mxu0 0
    %201 = vmatpush1.bf16.msra.mxu0 0
    %202 = vmatprep.subr.bf16.mxu0 0
    %203 = vmatpush1.bf16.msra.mxu0 0
    %204 = vmatprep.subr.bf16.mxu0 0
    %205 = vmatpush1.bf16.msra.mxu0 0
    %206 = vmatprep.subr.bf16.mxu0 0
    %207 = vmatpush1.bf16.msra.mxu0 0
    %208 = vmatprep.subr.bf16.mxu0 0
    %209 = vmatpush1.bf16.msra.mxu0 0
    %210 = vmatprep.subr.bf16.mxu0 0
    %211 = vmatpush1.bf16.msra.mxu0 0
    %212 = vmatprep.mubr.bf16.mxu0 0
    %213 = vmatmul.mubr.bf16.gmra.mrb[0].mxu0 %v157
    %v214 = vpop.f32.mrb[0].mxu0
    %v215 = vadd.f32 %v95, %v214
    %v216 = vpop.f32.mrb[0].mxu0
    %v217 = vpop.f32.mrb[0].mxu0
    %v218 = vadd.f32 %v95, %v217
    %v219 = vpop.f32.mrb[0].mxu0
    %220 = vmatprep.mubr.bf16.mxu0 0
    %221 = vmatmul.mubr.bf16.gmra.mrb[0].mxu0 %v160
    %v222 = vpop.f32.mrb[0].mxu0
    %v223 = vadd.f32 %v95, %v222
    %v224 = vpop.f32.mrb[0].mxu0
    %v225 = vpop.f32.mrb[0].mxu0
    %v226 = vadd.f32 %v95, %v225
    %v227 = vpop.f32.mrb[0].mxu0
    %228 = vmatprep.mubr.bf16.mxu0 0
    %229 = vmatmul.mubr.bf16.gmra.mrb[0].mxu0 %v163
    %v230 = vpop.f32.mrb[0].mxu0
    %v231 = vadd.f32 %v95, %v230
    %v232 = vpop.f32.mrb[0].mxu0
    %v233 = vpop.f32.mrb[0].mxu0
    %v234 = vadd.f32 %v95, %v233
    %v235 = vpop.f32.mrb[0].mxu0
    %236 = vmatprep.mubr.bf16.mxu0 0
    %237 = vmatmul.mubr.bf16.gmra.mrb[0].mxu0 %v166
    %v238 = vpop.f32.mrb[0].mxu0
    %v239 = vadd.f32 %v95, %v238
    %v240 = vpop.f32.mrb[0].mxu0
    %v241 = vpop.f32.mrb[0].mxu0
    %v242 = vadd.f32 %v95, %v241
    %v243 = vpop.f32.mrb[0].mxu0
    %244 = vmatprep.mubr.bf16.mxu0 0
    %245 = vmatmul.mubr.bf16.gmra.mrb[0].mxu0 %v169
    %v246 = vpop.f32.mrb[0].mxu0
    %v247 = vadd.f32 %v95, %v246
    %v248 = vpop.f32.mrb[0].mxu0
    %v249 = vpop.f32.mrb[0].mxu0
    %v250 = vadd.f32 %v95, %v249
    %v251 = vpop.f32.mrb[0].mxu0
    %252 = vmatprep.mubr.bf16.mxu0 0
    %253 = vmatmul.mubr.bf16.gmra.mrb[0].mxu0 %v172
    %v254 = vpop.f32.mrb[0].mxu0
    %v255 = vadd.f32 %v95, %v254
    %v256 = vpop.f32.mrb[0].mxu0
    %v257 = vpop.f32.mrb[0].mxu0
    %v258 = vadd.f32 %v95, %v257
    %v259 = vpop.f32.mrb[0].mxu0
    %260 = vmatprep.mubr.bf16.mxu0 0
    %261 = vmatmul.mubr.bf16.gmra.mrb[0].mxu0 %v175
    %v262 = vpop.f32.mrb[0].mxu0
    %v263 = vadd.f32 %v95, %v262
    %v264 = vpop.f32.mrb[0].mxu0
    %v265 = vpop.f32.mrb[0].mxu0
    %v266 = vadd.f32 %v95, %v265
    %v267 = vpop.f32.mrb[0].mxu0
    %268 = vmatprep.mubr.bf16.mxu0 0
    %269 = vmatmul.mubr.bf16.gmra.mrb[0].mxu0 %v178
    %v270 = vpop.f32.mrb[0].mxu0
    %v271 = vadd.f32 %v95, %v270
    %v272 = vpop.f32.mrb[0].mxu0
    %v273 = vpop.f32.mrb[0].mxu0
    %v274 = vadd.f32 %v95, %v273
    %v275 = vpop.f32.mrb[0].mxu0
    %276 = vdwg.mxu0
    %v277 = vmul.f32 %v215, %v215
    %v278 = vmul.f32 %v218, %v218
    %v279 = vmul.f32 %v223, %v223
    %v280 = vmul.f32 %v226, %v226
    %v281 = vmul.f32 %v231, %v231
    %v282 = vmul.f32 %v234, %v234
    %v283 = vmul.f32 %v239, %v239
    %v284 = vmul.f32 %v242, %v242
    %v285 = vmul.f32 %v247, %v247
    %v286 = vmul.f32 %v250, %v250
    %v287 = vmul.f32 %v255, %v255
    %v288 = vmul.f32 %v258, %v258
    %v289 = vmul.f32 %v263, %v263
    %v290 = vmul.f32 %v266, %v266
    %v291 = vmul.f32 %v271, %v271
    %v292 = vmul.f32 %v274, %v274
    %v293 = vmul.f32 %v215, %v277
    %v294 = vmul.f32 %v218, %v278
    %v295 = vmul.f32 %v223, %v279
    %v296 = vmul.f32 %v226, %v280
    %v297 = vmul.f32 %v231, %v281
    %v298 = vmul.f32 %v234, %v282
    %v299 = vmul.f32 %v239, %v283
    %v300 = vmul.f32 %v242, %v284
    %v301 = vmul.f32 %v247, %v285
    %v302 = vmul.f32 %v250, %v286
    %v303 = vmul.f32 %v255, %v287
    %v304 = vmul.f32 %v258, %v288
    %v305 = vmul.f32 %v263, %v289
    %v306 = vmul.f32 %v266, %v290
    %v307 = vmul.f32 %v271, %v291
    %v308 = vmul.f32 %v274, %v292
    %v309 = vmul.f32 %v293, 0.044715
    %v310 = vmul.f32 %v294, 0.044715
    %v311 = vmul.f32 %v295, 0.044715
    %v312 = vmul.f32 %v296, 0.044715
    %v313 = vmul.f32 %v297, 0.044715
    %v314 = vmul.f32 %v298, 0.044715
    %v315 = vmul.f32 %v299, 0.044715
    %v316 = vmul.f32 %v300, 0.044715
    %v317 = vmul.f32 %v301, 0.044715
    %v318 = vmul.f32 %v302, 0.044715
    %v319 = vmul.f32 %v303, 0.044715
    %v320 = vmul.f32 %v304, 0.044715
    %v321 = vmul.f32 %v305, 0.044715
    %v322 = vmul.f32 %v306, 0.044715
    %v323 = vmul.f32 %v307, 0.044715
    %v324 = vmul.f32 %v308, 0.044715
    %v325 = vadd.f32 %v215, %v309
    %v326 = vadd.f32 %v218, %v310
    %v327 = vadd.f32 %v223, %v311
    %v328 = vadd.f32 %v226, %v312
    %v329 = vadd.f32 %v231, %v313
    %v330 = vadd.f32 %v234, %v314
    %v331 = vadd.f32 %v239, %v315
    %v332 = vadd.f32 %v242, %v316
    %v333 = vadd.f32 %v247, %v317
    %v334 = vadd.f32 %v250, %v318
    %v335 = vadd.f32 %v255, %v319
    %v336 = vadd.f32 %v258, %v320
    %v337 = vadd.f32 %v263, %v321
    %v338 = vadd.f32 %v266, %v322
    %v339 = vadd.f32 %v271, %v323
    %v340 = vadd.f32 %v274, %v324
    %v341 = vmul.f32 %v325, 0.7978846
    %v342 = vmul.f32 %v326, 0.7978846
    %v343 = vmul.f32 %v327, 0.7978846
    %v344 = vmul.f32 %v328, 0.7978846
    %v345 = vmul.f32 %v329, 0.7978846
    %v346 = vmul.f32 %v330, 0.7978846
    %v347 = vmul.f32 %v331, 0.7978846
    %v348 = vmul.f32 %v332, 0.7978846
    %v349 = vmul.f32 %v333, 0.7978846
    %v350 = vmul.f32 %v334, 0.7978846
    %v351 = vmul.f32 %v335, 0.7978846
    %v352 = vmul.f32 %v336, 0.7978846
    %v353 = vmul.f32 %v337, 0.7978846
    %v354 = vmul.f32 %v338, 0.7978846
    %v355 = vmul.f32 %v339, 0.7978846
    %v356 = vmul.f32 %v340, 0.7978846
    %v357 = vtanh.pop %v341
    %v358 = vtanh.pop %v342
    %v359 = vtanh.pop %v343
    %v360 = vtanh.pop %v344
    %v361 = vtanh.pop %v345
    %v362 = vtanh.pop %v346
    %v363 = vtanh.pop %v347
    %v364 = vtanh.pop %v348
    %v365 = vtanh.pop %v349
    %v366 = vtanh.pop %v350
    %v367 = vtanh.pop %v351
    %v368 = vtanh.pop %v352
    %v369 = vtanh.pop %v353
    %v370 = vtanh.pop %v354
    %v371 = vtanh.pop %v355
    %v372 = vtanh.pop %v356
    %v373 = vadd.f32 %v357, 1.0
    %v374 = vadd.f32 %v358, 1.0
    %v375 = vadd.f32 %v359, 1.0
    %v376 = vadd.f32 %v360, 1.0
    %v377 = vadd.f32 %v361, 1.0
    %v378 = vadd.f32 %v362, 1.0
    %v379 = vadd.f32 %v363, 1.0
    %v380 = vadd.f32 %v364, 1.0
    %v381 = vadd.f32 %v365, 1.0
    %v382 = vadd.f32 %v366, 1.0
    %v383 = vadd.f32 %v367, 1.0
    %v384 = vadd.f32 %v368, 1.0
    %v385 = vadd.f32 %v369, 1.0
    %v386 = vadd.f32 %v370, 1.0
    %v387 = vadd.f32 %v371, 1.0
    %v388 = vadd.f32 %v372, 1.0
    %v389 = vmul.f32 %v373, 0.5
    %v390 = vmul.f32 %v374, 0.5
    %v391 = vmul.f32 %v375, 0.5
    %v392 = vmul.f32 %v376, 0.5
    %v393 = vmul.f32 %v377, 0.5
    %v394 = vmul.f32 %v378, 0.5
    %v395 = vmul.f32 %v379, 0.5
    %v396 = vmul.f32 %v380, 0.5
    %v397 = vmul.f32 %v381, 0.5
    %v398 = vmul.f32 %v382, 0.5
    %v399 = vmul.f32 %v383, 0.5
    %v400 = vmul.f32 %v384, 0.5
    %v401 = vmul.f32 %v385, 0.5
    %v402 = vmul.f32 %v386, 0.5
    %v403 = vmul.f32 %v387, 0.5
    %v404 = vmul.f32 %v388, 0.5
    %v405 = vmul.f32 %v215, %v389
    %v406 = vmul.f32 %v218, %v390
    %v407 = vmul.f32 %v223, %v391
    %v408 = vmul.f32 %v226, %v392
    %v409 = vmul.f32 %v231, %v393
    %v410 = vmul.f32 %v234, %v394
    %v411 = vmul.f32 %v239, %v395
    %v412 = vmul.f32 %v242, %v396
    %v413 = vmul.f32 %v247, %v397
    %v414 = vmul.f32 %v250, %v398
    %v415 = vmul.f32 %v255, %v399
    %v416 = vmul.f32 %v258, %v400
    %v417 = vmul.f32 %v263, %v401
    %v418 = vmul.f32 %v266, %v402
    %v419 = vmul.f32 %v271, %v403
    %v420 = vmul.f32 %v274, %v404
    %v421 = vld [vmem:[#allocation2] sm:$0xff]
    %v422 = vadd.f32 %v405, %v406
    %v423 = vrot.slane %v422, 4
    %v424 = vadd.f32 %v422, %v423
    %v425 = vrot.slane %v424, 2
    %v426 = vadd.f32 %v424, %v425
    %v427 = vrot.slane %v426, 1
    %v428 = vadd.f32 %v426, %v427
    %v429 = vadd.f32 %v407, %v408
    %v430 = vrot.slane %v429, 4
    %v431 = vadd.f32 %v429, %v430
    %v432 = vrot.slane %v431, 2
    %v433 = vadd.f32 %v431, %v432
    %v434 = vrot.slane %v433, 1
    %v435 = vadd.f32 %v433, %v434
    %v436 = vadd.f32 %v409, %v410
    %v437 = vrot.slane %v436, 4
    %v438 = vadd.f32 %v436, %v437
    %v439 = vrot.slane %v438, 2
    %v440 = vadd.f32 %v438, %v439
    %v441 = vrot.slane %v440, 1
    %v442 = vadd.f32 %v440, %v441
    %v443 = vadd.f32 %v411, %v412
    %v444 = vrot.slane %v443, 4
    %v445 = vadd.f32 %v443, %v444
    %v446 = vrot.slane %v445, 2
    %v447 = vadd.f32 %v445, %v446
    %v448 = vrot.slane %v447, 1
    %v449 = vadd.f32 %v447, %v448
    %v450 = vadd.f32 %v413, %v414
    %v451 = vrot.slane %v450, 4
    %v452 = vadd.f32 %v450, %v451
    %v453 = vrot.slane %v452, 2
    %v454 = vadd.f32 %v452, %v453
    %v455 = vrot.slane %v454, 1
    %v456 = vadd.f32 %v454, %v455
    %v457 = vadd.f32 %v415, %v416
    %v458 = vrot.slane %v457, 4
    %v459 = vadd.f32 %v457, %v458
    %v460 = vrot.slane %v459, 2
    %v461 = vadd.f32 %v459, %v460
    %v462 = vrot.slane %v461, 1
    %v463 = vadd.f32 %v461, %v462
    %v464 = vadd.f32 %v417, %v418
    %v465 = vrot.slane %v464, 4
    %v466 = vadd.f32 %v464, %v465
    %v467 = vrot.slane %v466, 2
    %v468 = vadd.f32 %v466, %v467
    %v469 = vrot.slane %v468, 1
    %v470 = vadd.f32 %v468, %v469
    %v471 = vadd.f32 %v419, %v420
    %v472 = vrot.slane %v471, 4
    %v473 = vadd.f32 %v471, %v472
    %v474 = vrot.slane %v473, 2
    %v475 = vadd.f32 %v473, %v474
    %v476 = vrot.slane %v475, 1
    %v477 = vadd.f32 %v475, %v476
    %vm486 = vcmask 1041409
    %v487 = vsel %vm486, %v435, %v428
    %vm488 = vcmask 1042434
    %v489 = vsel %vm488, %v442, %v487
    %vm490 = vcmask 1043459
    %v491 = vsel %vm490, %v449, %v489
    %vm492 = vcmask 1044484
    %v493 = vsel %vm492, %v456, %v491
    %vm494 = vcmask 1045509
    %v495 = vsel %vm494, %v463, %v493
    %vm496 = vcmask 1046534
    %v497 = vsel %vm496, %v470, %v495
    %vm498 = vcmask 1047559
    %v499 = vsel %vm498, %v477, %v497
    %v501 = vadd.f32 %v421, %v499
    %502 = vst [vmem:[#allocation2] sm:$0xff] %v501
    // Predicated region
    $region38: #{tpu_custom_call.1} parent=1 // pred_check
      %p503 = pneg %p63
    $region39: #{tpu_custom_call.1} parent=1 // pred_check_branch
      %505 = sbr.rel (%p503) target = $region41
    $region40: #{tpu_custom_call.1} parent=1 // pred_region
      %v506 = vld [vmem:[#allocation2] sm:$0xff]
      %v507 = vld [vmem:[#allocation8] sm:$0xf]
      %v508 = vld [vmem:[#allocation8 + $0x4] sm:$0xf]
      %v509 = vld [vmem:[#allocation8 + $0x8] sm:$0xf]
      %v510 = vld [vmem:[#allocation8 + $0xc] sm:$0xf]
      %v511 = vld [vmem:[#allocation8 + $0x10] sm:$0xf]
      %v512 = vld [vmem:[#allocation8 + $0x14] sm:$0xf]
      %v513 = vld [vmem:[#allocation8 + $0x18] sm:$0xf]
      %v514 = vld [vmem:[#allocation8 + $0x1c] sm:$0xf]
      %v515 = vld [vmem:[#allocation8 + $0x20] sm:$0xf]
      %v516 = vld [vmem:[#allocation8 + $0x24] sm:$0xf]
      %v517 = vld [vmem:[#allocation8 + $0x28] sm:$0xf]
      %v518 = vld [vmem:[#allocation8 + $0x2c] sm:$0xf]
      %v519 = vld [vmem:[#allocation8 + $0x30] sm:$0xf]
      %v520 = vld [vmem:[#allocation8 + $0x34] sm:$0xf]
      %v521 = vld [vmem:[#allocation8 + $0x38] sm:$0xf]
      %v522 = vld [vmem:[#allocation8 + $0x3c] sm:$0xf]
      %v523 = vunpack.c.l.bf16 %v507
      %v524 = vunpack.c.l.bf16 %v508
      %v525 = vunpack.c.l.bf16 %v509
      %v526 = vunpack.c.l.bf16 %v510
      %v527 = vunpack.c.l.bf16 %v511
      %v528 = vunpack.c.l.bf16 %v512
      %v529 = vunpack.c.l.bf16 %v513
      %v530 = vunpack.c.l.bf16 %v514
      %v531 = vunpack.c.l.bf16 %v515
      %v532 = vunpack.c.l.bf16 %v516
      %v533 = vunpack.c.l.bf16 %v517
      %v534 = vunpack.c.l.bf16 %v518
      %v535 = vunpack.c.l.bf16 %v519
      %v536 = vunpack.c.l.bf16 %v520
      %v537 = vunpack.c.l.bf16 %v521
      %v538 = vunpack.c.l.bf16 %v522
      %v539 = vld [vmem:[%s4] sm:$0x1]
      %v541 = vlaneseq
      %v542 = vshrl.u32 %v541, 7
      %v543 = vsub.s32 0, %v542
      %v544 = vrot.slane %v539, %v543
      %546 = vmatprep.subr.mxu0 0.0
      %547 = vmatpush1.msra.mxu0 %v523
      %548 = vmatprep.subr.mxu0 0.0
      %549 = vmatpush1.msra.mxu0 %v524
      %550 = vmatprep.subr.mxu0 0.0
      %551 = vmatpush1.msra.mxu0 %v525
      %552 = vmatprep.subr.mxu0 0.0
      %553 = vmatpush1.msra.mxu0 %v526
      %554 = vmatprep.subr.mxu0 0.0
      %555 = vmatpush1.msra.mxu0 %v527
      %556 = vmatprep.subr.mxu0 0.0
      %557 = vmatpush1.msra.mxu0 %v528
      %558 = vmatprep.subr.mxu0 0.0
      %559 = vmatpush1.msra.mxu0 %v529
      %560 = vmatprep.subr.mxu0 0.0
      %561 = vmatpush1.msra.mxu0 %v530
      %562 = vmatprep.subr.mxu0 0.0
      %563 = vmatpush1.msra.mxu0 %v531
      %564 = vmatprep.subr.mxu0 0.0
      %565 = vmatpush1.msra.mxu0 %v532
      %566 = vmatprep.subr.mxu0 0.0
      %567 = vmatpush1.msra.mxu0 %v533
      %568 = vmatprep.subr.mxu0 0.0
      %569 = vmatpush1.msra.mxu0 %v534
      %570 = vmatprep.subr.mxu0 0.0
      %571 = vmatpush1.msra.mxu0 %v535
      %572 = vmatprep.subr.mxu0 0.0
      %573 = vmatpush1.msra.mxu0 %v536
      %574 = vmatprep.subr.mxu0 0.0
      %575 = vmatpush1.msra.mxu0 %v537
      %576 = vmatprep.subr.mxu0 0.0
      %577 = vmatpush1.msra.mxu0 %v538
      %578 = vmatprep.subr.mxu0 0.0
      %579 = vmatpush1.msra.mxu0 0.0
      %580 = vmatprep.subr.mxu0 0.0
      %581 = vmatpush1.msra.mxu0 0.0
      %582 = vmatprep.subr.mxu0 0.0
      %583 = vmatpush1.msra.mxu0 0.0
      %584 = vmatprep.subr.mxu0 0.0
      %585 = vmatpush1.msra.mxu0 0.0
      %586 = vmatprep.subr.mxu0 0.0
      %587 = vmatpush1.msra.mxu0 0.0
      %588 = vmatprep.subr.mxu0 0.0
      %589 = vmatpush1.msra.mxu0 0.0
      %590 = vmatprep.subr.mxu0 0.0
      %591 = vmatpush1.msra.mxu0 0.0
      %592 = vmatprep.subr.mxu0 0.0
      %593 = vmatpush1.msra.mxu0 0.0
      %594 = vmatprep.subr.mxu0 0.0
      %595 = vmatpush1.msra.mxu0 0.0
      %596 = vmatprep.subr.mxu0 0.0
      %597 = vmatpush1.msra.mxu0 0.0
      %598 = vmatprep.subr.mxu0 0.0
      %599 = vmatpush1.msra.mxu0 0.0
      %600 = vmatprep.subr.mxu0 0.0
      %601 = vmatpush1.msra.mxu0 0.0
      %602 = vmatprep.subr.mxu0 0.0
      %603 = vmatpush1.msra.mxu0 0.0
      %604 = vmatprep.subr.mxu0 0.0
      %605 = vmatpush1.msra.mxu0 0.0
      %606 = vmatprep.subr.mxu0 0.0
      %607 = vmatpush1.msra.mxu0 0.0
      %608 = vmatprep.subr.mxu0 0.0
      %609 = vmatpush1.msra.mxu0 0.0
      %610 = vmatprep.mubr.f32.mxu0 0.0
      %611 = vmatmul.mubr.f32.gmra.mrb[0].mxu0 %v506
      %v612 = vpop.f32.mrb[0].mxu0
      %v613 = vadd.f32 %v544, %v612
      %v614 = vpop.f32.mrb[0].mxu0
      %615 = vdwg.mxu0
      %616 = vst [vmem:[#allocation9] sm:$0xff] %v613
    $region41: #{tpu_custom_call.1} parent=1 // pred_fallthru
      _
    // Predicated region
    $region42: #{tpu_custom_call.1} parent=1 // pred_check
      _
    $region43: #{tpu_custom_call.1} parent=1 // pred_check_branch
      %618 = sbr.rel (0) target = $region45
    $region44: #{tpu_custom_call.1} parent=1 // pred_region
      %s620 = ssub.s32 128, 128
      %621 = vsyncadd [#allocation5], %s620
      %s623 = sshll.u32 [#allocation9], 4
      %s624 = int_to_ptr.vmem [resolvable:$true] %s623
      %626 = dma.vmem_to_hbm [thread:$0]  %s624, 128, %s5, [#allocation5]
    $region45: #{tpu_custom_call.1} parent=1 // pred_fallthru
      _
    // Predicated region
    $region46: #{tpu_custom_call.1} parent=1 // pred_check
      _
    $region47: #{tpu_custom_call.1} parent=1 // pred_check_branch
      %628 = sbr.rel (0) target = $region49
    $region48: #{tpu_custom_call.1} parent=1 // pred_region
      %629 = dma.done [#allocation5], 128
    $region49: #{tpu_custom_call.1} parent=1 // pred_fallthru
      _
    %630 = vsyncpa [#allocation4], 1
    %631 = vsyncpa [#allocation7], 1
    %632 = vsyncpa [#allocation5], 1

</llo_original>
